<compile_context>
chip_gen: v6e
topology: v6e:2x2x1
jax: 0.10.0
libtpu: 0.0.40
codegen_flags: <defaults>
</compile_context>

<pallas_src>
import functools

import jax
import jax.numpy as jnp
import numpy as np
from jax.experimental import pallas as pl
from jax.experimental.pallas import tpu as pltpu

HIDDEN = 64           # MLPBase hidden size
FUSED = 2 * HIDDEN    # actor|critic hidden fused along lanes -> 128 (lane-dense)


def _log_softmax(logits):
    m = jnp.max(logits, axis=-1, keepdims=True)
    z = logits - m
    return z - jnp.log(jnp.sum(jnp.exp(z), axis=-1, keepdims=True))


def _argmax_and_logprob(logp):
    """First-occurrence argmax along last axis + gathered log-prob (no gather op)."""
    w = logp.shape[-1]
    idx = jax.lax.broadcasted_iota(jnp.int32, logp.shape, 1)
    m = jnp.max(logp, axis=-1, keepdims=True)
    arg = jnp.min(jnp.where(logp == m, idx, w), axis=-1, keepdims=True)       # (TB,1) i32
    lp = jnp.sum(jnp.where(idx == arg, logp, 0.0), axis=-1, keepdims=True)    # (TB,1) f32
    return arg, lp


def _make_kernel(tb, num_actions):
    A = num_actions
    pad = FUSED - (6 + A)

    def kernel(x_ref, w1_ref, w2_ref, wh_ref, b_ref, out_ref):
        x = x_ref[...]                       # already f32; no redundant astype
        b1 = b_ref[0:1, :]
        b2 = b_ref[1:2, :]
        bh = b_ref[2:3, :]

        # Fused towers: lanes 0:64 = actor hidden, lanes 64:128 = critic hidden.
        h1 = jnp.tanh(jnp.dot(x, w1_ref[...], preferred_element_type=jnp.float32) + b1)
        h2 = jnp.tanh(jnp.dot(h1, w2_ref[...], preferred_element_type=jnp.float32) + b2)

        # Single lane-dense head matmul: cols [value | q_logits | clf_logits | 0-pad].
        heads = jnp.dot(h2, wh_ref[...], preferred_element_type=jnp.float32) + bh

        value = heads[:, 0:1]
        # log-softmax computed per-head on sliced views so the zero-padded lanes
        # never touch the normalizers.
        q = _log_softmax(heads[:, 1:1 + A])
        clf = _log_softmax(heads[:, 1 + A:3 + A])

        act, lp_a = _argmax_and_logprob(q)      # deterministic=True -> dist.mode()
        cls, lp_c = _argmax_and_logprob(clf)
        alp = lp_a + lp_c

        # One unmasked lane-dense store:
        # [value | q(A) | clf(2) | action_log_probs | action | classif | zeros]
        out_ref[...] = jnp.concatenate(
            [value, q, clf, alp,
             act.astype(jnp.float32), cls.astype(jnp.float32),
             jnp.zeros((tb, pad), jnp.float32)],
            axis=-1,
        )

    return kernel


@functools.partial(jax.jit, static_argnames=("num_actions",))
def mynet_act(x, packed_params, states, *, num_actions):
    """Returns (value, action, Q_values, clf_proba, action_log_probs, states)."""
    W1, W2, Wh, Ball = packed_params
    B, obs_dim = x.shape
    A = num_actions
    assert 1 <= A <= FUSED - 6, "num_actions too large for packed head layout"

    # Batch tiling: whole batch in one block at small B; 1024-row tiles beyond that.
    if B <= 1024:
        TB = B
    else:
        TB = 1024
        assert B % TB == 0, "large-batch path requires B % 1024 == 0"

    kernel = _make_kernel(TB, A)
    out = pl.pallas_call(
        kernel,
        out_shape=jax.ShapeDtypeStruct((B, FUSED), jnp.float32),
        grid_spec=pltpu.PrefetchScalarGridSpec(
            num_scalar_prefetch=0,
            grid=(B // TB,),
            in_specs=[
                pl.BlockSpec((TB, obs_dim), lambda i: (i, 0)),
                pl.BlockSpec(W1.shape, lambda i: (0, 0)),    # weights stay VMEM-resident
                pl.BlockSpec(W2.shape, lambda i: (0, 0)),
                pl.BlockSpec(Wh.shape, lambda i: (0, 0)),
                pl.BlockSpec(Ball.shape, lambda i: (0, 0)),
            ],
            out_specs=pl.BlockSpec((TB, FUSED), lambda i: (i, 0)),
        ),
        compiler_params=pltpu.CompilerParams(
            dimension_semantics=("parallel",),
        ),
    )(x, W1, W2, Wh, Ball)

    # Static slices of the packed slab (fused into one executable by jit).
    value = out[:, 0:1]
    q_values = out[:, 1:1 + A]
    clf_proba = out[:, 1 + A:3 + A]            # normalized log-probs == torch dist.logits
    action_log_probs = out[:, 3 + A:4 + A]
    action = out[:, 4 + A:6 + A].astype(jnp.int32)   # [env action, classifier action]

    return value, action, q_values, clf_proba, action_log_probs, states


# --------------------------- parameter construction ---------------------------

def init_params(key, obs_dim, num_actions, hidden=HIDDEN):
    """Raw per-layer params with PyTorch-Linear-style init; weights as (in, out)."""
    ks = jax.random.split(key, 14)

    def lin(kw, kb, fan_in, fan_out):
        scale = 1.0 / jnp.sqrt(fan_in)
        w = jax.random.uniform(kw, (fan_in, fan_out), jnp.float32, -scale, scale)
        b = jax.random.uniform(kb, (1, fan_out), jnp.float32, -scale, scale)
        return w, b

    wa1, ba1 = lin(ks[0], ks[1], obs_dim, hidden)
    wa2, ba2 = lin(ks[2], ks[3], hidden, hidden)
    wc1, bc1 = lin(ks[4], ks[5], obs_dim, hidden)
    wc2, bc2 = lin(ks[6], ks[7], hidden, hidden)
    wcl, bcl = lin(ks[8], ks[9], hidden, 1)
    wd, bd = lin(ks[10], ks[11], hidden, num_actions)
    wf, bf = lin(ks[12], ks[13], hidden, 2)
    return (wa1, ba1, wa2, ba2, wc1, bc1, wc2, bc2, wcl, bcl, wd, bd, wf, bf)


def pack_params(raw, obs_dim, num_actions):
    """One-time host-side packing into 4 lane-dense slabs."""
    (wa1, ba1, wa2, ba2, wc1, bc1, wc2, bc2, wcl, bcl, wd, bd, wf, bf) = raw
    H, A = HIDDEN, num_actions

    W1 = jnp.concatenate([wa1, wc1], axis=1)                       # (obs, 128)
    b1 = jnp.concatenate([ba1, bc1], axis=1)                       # (1, 128)

    W2 = jnp.zeros((2 * H, 2 * H), jnp.float32)
    W2 = W2.at[:H, :H].set(wa2).at[H:, H:].set(wc2)                # block-diagonal
    b2 = jnp.concatenate([ba2, bc2], axis=1)

    Wh = jnp.zeros((2 * H, 2 * H), jnp.float32)
    Wh = Wh.at[H:, 0:1].set(wcl)            # value        <- critic hidden
    Wh = Wh.at[:H, 1:1 + A].set(wd)         # dist logits  <- actor hidden
    Wh = Wh.at[:H, 1 + A:3 + A].set(wf)     # clf logits   <- actor hidden
    bh = jnp.zeros((1, 2 * H), jnp.float32)
    bh = bh.at[:, 0:1].set(bcl).at[:, 1:1 + A].set(bd).at[:, 1 + A:3 + A].set(bf)

    Ball = jnp.concatenate([b1, b2, bh], axis=0)                   # (3, 128)
    return (W1, W2, Wh, Ball)


# ----------------------------- plain-JAX reference ----------------------------

def mynet_act_ref(x, raw, num_actions):
    (wa1, ba1, wa2, ba2, wc1, bc1, wc2, bc2, wcl, bcl, wd, bd, wf, bf) = raw
    hp = jax.lax.Precision.HIGHEST
    dot = lambda a, b: jnp.dot(a, b, precision=hp)
    ha = jnp.tanh(dot(x, wa1) + ba1)
    ha = jnp.tanh(dot(ha, wa2) + ba2)
    hc = jnp.tanh(dot(x, wc1) + bc1)
    hc = jnp.tanh(dot(hc, wc2) + bc2)
    value = dot(hc, wcl) + bcl
    q = jax.nn.log_softmax(dot(ha, wd) + bd, axis=-1)
    clf = jax.nn.log_softmax(dot(ha, wf) + bf, axis=-1)
    action = jnp.argmax(q, axis=-1, keepdims=True).astype(jnp.int32)
    classif = jnp.argmax(clf, axis=-1, keepdims=True).astype(jnp.int32)
    alp = jnp.take_along_axis(q, action, axis=-1) + jnp.take_along_axis(clf, classif, axis=-1)
    return value, jnp.concatenate([action, classif], axis=1), q, clf, alp


if __name__ == "__main__":
    key = jax.random.PRNGKey(0)
    k_x, k_p = jax.random.split(key)

    B, OBS_DIM, NUM_ACTIONS = 8, 32, 4
    x = jax.random.normal(k_x, (B, OBS_DIM), dtype=jnp.float32)
    states = jnp.zeros((B, 1), dtype=jnp.float32)   # MLPBase.state_size == 1 (passthrough)
    masks = jnp.ones((B, 1), dtype=jnp.float32)     # unused by the non-recurrent MLP base

    raw = init_params(k_p, OBS_DIM, NUM_ACTIONS)
    packed = pack_params(raw, OBS_DIM, NUM_ACTIONS)

    outs = mynet_act(x, packed, states, num_actions=NUM_ACTIONS)
    value, action, q_values, clf_proba, action_log_probs, states_out = jax.block_until_ready(outs)

    # shape / dtype checks (6-tuple matches the PyTorch act() signature)
    assert value.shape == (B, 1)
    assert action.shape == (B, 2) and action.dtype == jnp.int32
    assert q_values.shape == (B, NUM_ACTIONS)
    assert clf_proba.shape == (B, 2)
    assert action_log_probs.shape == (B, 1)
    assert states_out.shape == states.shape

    # numerical check vs plain-JAX reference (loose: MXU pass precision differs)
    rv, ra, rq, rc, rl = mynet_act_ref(x, raw, NUM_ACTIONS)
    np.testing.assert_allclose(np.asarray(value), np.asarray(rv), rtol=2e-2, atol=2e-2)
    np.testing.assert_allclose(np.asarray(q_values), np.asarray(rq), rtol=2e-2, atol=2e-2)
    np.testing.assert_allclose(np.asarray(clf_proba), np.asarray(rc), rtol=2e-2, atol=2e-2)
    np.testing.assert_allclose(np.asarray(action_log_probs), np.asarray(rl), rtol=2e-2, atol=2e-2)

    # self-consistency: in-kernel argmax matches argmax of the kernel's own logits
    q_np, c_np, a_np = map(np.asarray, (q_values, clf_proba, action))
    assert np.array_equal(a_np[:, 0], np.argmax(q_np, axis=-1))
    assert np.array_equal(a_np[:, 1], np.argmax(c_np, axis=-1))

    print("KERNEL_OK")
</pallas_src>

<mosaic_0001>
module attributes {stable_mosaic.version = 11 : i64} {
  func.func @kernel(%arg0: i32, %arg1: memref<8x32xf32, #tpu.memory_space<vmem>>, %arg2: memref<32x128xf32, #tpu.memory_space<vmem>>, %arg3: memref<128x128xf32, #tpu.memory_space<vmem>>, %arg4: memref<128x128xf32, #tpu.memory_space<vmem>>, %arg5: memref<3x128xf32, #tpu.memory_space<vmem>>, %arg6: memref<8x128xf32, #tpu.memory_space<vmem>>) attributes {dimension_semantics = [#tpu.dimension_semantics<parallel>], iteration_bounds = array<i64: 1>, scalar_prefetch = 0 : i64, scratch_operands = 0 : i64, tpu.core_type = #tpu.core_type<tc>, window_params = [{transform_indices = @transform_0, window_bounds = array<i64: 8, 32>}, {pipeline_mode = #tpu.pipeline_mode<synchronous>, transform_indices = @transform_1, window_bounds = array<i64: 32, 128>}, {pipeline_mode = #tpu.pipeline_mode<synchronous>, transform_indices = @transform_2, window_bounds = array<i64: 128, 128>}, {pipeline_mode = #tpu.pipeline_mode<synchronous>, transform_indices = @transform_3, window_bounds = array<i64: 128, 128>}, {pipeline_mode = #tpu.pipeline_mode<synchronous>, transform_indices = @transform_4, window_bounds = array<i64: 3, 128>}, {transform_indices = @transform_5, window_bounds = array<i64: 8, 128>}]} {
    %c0 = arith.constant 0 : index
    %c0_0 = arith.constant 0 : index
    %0 = vector.load %arg1[%c0, %c0_0] : memref<8x32xf32, #tpu.memory_space<vmem>>, vector<8x32xf32>
    %c0_1 = arith.constant 0 : index
    %c0_2 = arith.constant 0 : index
    %1 = vector.load %arg5[%c0_1, %c0_2] : memref<3x128xf32, #tpu.memory_space<vmem>>, vector<1x128xf32>
    %c1 = arith.constant 1 : index
    %c0_3 = arith.constant 0 : index
    %2 = vector.load %arg5[%c1, %c0_3] : memref<3x128xf32, #tpu.memory_space<vmem>>, vector<1x128xf32>
    %c2 = arith.constant 2 : index
    %c0_4 = arith.constant 0 : index
    %3 = vector.load %arg5[%c2, %c0_4] : memref<3x128xf32, #tpu.memory_space<vmem>>, vector<1x128xf32>
    %c0_5 = arith.constant 0 : index
    %c0_6 = arith.constant 0 : index
    %4 = vector.load %arg2[%c0_5, %c0_6] : memref<32x128xf32, #tpu.memory_space<vmem>>, vector<32x128xf32>
    %cst = arith.constant dense<0.000000e+00> : vector<8x128xf32>
    %5 = tpu.matmul %0, %4, %cst {dimension_numbers = #tpu.dot_dimension_numbers<[1], [0], [0], [1], [0, 0, 1, 1], [], []>} : vector<8x32xf32>, vector<32x128xf32>, vector<8x128xf32> -> vector<8x128xf32>
    %6 = vector.broadcast %1 : vector<1x128xf32> to vector<8x128xf32>
    %7 = arith.addf %5, %6 : vector<8x128xf32>
    %8 = math.tanh %7 : vector<8x128xf32>
    %c0_7 = arith.constant 0 : index
    %c0_8 = arith.constant 0 : index
    %9 = vector.load %arg3[%c0_7, %c0_8] : memref<128x128xf32, #tpu.memory_space<vmem>>, vector<128x128xf32>
    %cst_9 = arith.constant dense<0.000000e+00> : vector<8x128xf32>
    %10 = tpu.matmul %8, %9, %cst_9 {dimension_numbers = #tpu.dot_dimension_numbers<[1], [0], [0], [1], [0, 0, 1, 1], [], []>} : vector<8x128xf32>, vector<128x128xf32>, vector<8x128xf32> -> vector<8x128xf32>
    %11 = vector.broadcast %2 : vector<1x128xf32> to vector<8x128xf32>
    %12 = arith.addf %10, %11 : vector<8x128xf32>
    %13 = math.tanh %12 : vector<8x128xf32>
    %c0_10 = arith.constant 0 : index
    %c0_11 = arith.constant 0 : index
    %14 = vector.load %arg4[%c0_10, %c0_11] : memref<128x128xf32, #tpu.memory_space<vmem>>, vector<128x128xf32>
    %cst_12 = arith.constant dense<0.000000e+00> : vector<8x128xf32>
    %15 = tpu.matmul %13, %14, %cst_12 {dimension_numbers = #tpu.dot_dimension_numbers<[1], [0], [0], [1], [0, 0, 1, 1], [], []>} : vector<8x128xf32>, vector<128x128xf32>, vector<8x128xf32> -> vector<8x128xf32>
    %16 = vector.broadcast %3 : vector<1x128xf32> to vector<8x128xf32>
    %17 = arith.addf %15, %16 : vector<8x128xf32>
    %18 = vector.extract_strided_slice %17 {offsets = [0, 0], sizes = [8, 1], strides = [1, 1]} : vector<8x128xf32> to vector<8x1xf32>
    %19 = vector.extract_strided_slice %17 {offsets = [0, 1], sizes = [8, 4], strides = [1, 1]} : vector<8x128xf32> to vector<8x4xf32>
    %cst_13 = arith.constant dense<0xFF800000> : vector<8xf32>
    %20 = vector.multi_reduction <maximumf>, %19, %cst_13 [1] : vector<8x4xf32> to vector<8xf32>
    %21 = vector.shape_cast %20 : vector<8xf32> to vector<8x1xf32>
    %22 = vector.broadcast %21 : vector<8x1xf32> to vector<8x4xf32>
    %23 = arith.subf %19, %22 : vector<8x4xf32>
    %24 = math.exp %23 : vector<8x4xf32>
    %cst_14 = arith.constant dense<0.000000e+00> : vector<8xf32>
    %25 = vector.multi_reduction <add>, %24, %cst_14 [1] : vector<8x4xf32> to vector<8xf32>
    %26 = vector.shape_cast %25 : vector<8xf32> to vector<8x1xf32>
    %27 = math.log %26 : vector<8x1xf32>
    %28 = vector.broadcast %27 : vector<8x1xf32> to vector<8x4xf32>
    %29 = arith.subf %23, %28 : vector<8x4xf32>
    %30 = vector.extract_strided_slice %17 {offsets = [0, 5], sizes = [8, 2], strides = [1, 1]} : vector<8x128xf32> to vector<8x2xf32>
    %cst_15 = arith.constant dense<0xFF800000> : vector<8xf32>
    %31 = vector.multi_reduction <maximumf>, %30, %cst_15 [1] : vector<8x2xf32> to vector<8xf32>
    %32 = vector.shape_cast %31 : vector<8xf32> to vector<8x1xf32>
    %33 = vector.broadcast %32 : vector<8x1xf32> to vector<8x2xf32>
    %34 = arith.subf %30, %33 : vector<8x2xf32>
    %35 = math.exp %34 : vector<8x2xf32>
    %cst_16 = arith.constant dense<0.000000e+00> : vector<8xf32>
    %36 = vector.multi_reduction <add>, %35, %cst_16 [1] : vector<8x2xf32> to vector<8xf32>
    %37 = vector.shape_cast %36 : vector<8xf32> to vector<8x1xf32>
    %38 = math.log %37 : vector<8x1xf32>
    %39 = vector.broadcast %38 : vector<8x1xf32> to vector<8x2xf32>
    %40 = arith.subf %34, %39 : vector<8x2xf32>
    %41 = tpu.iota {dimensions = array<i32: 1>} : vector<8x4xi32>
    %cst_17 = arith.constant dense<0xFF800000> : vector<8xf32>
    %42 = vector.multi_reduction <maximumf>, %29, %cst_17 [1] : vector<8x4xf32> to vector<8xf32>
    %43 = vector.shape_cast %42 : vector<8xf32> to vector<8x1xf32>
    %44 = vector.broadcast %43 : vector<8x1xf32> to vector<8x4xf32>
    %45 = arith.cmpf oeq, %29, %44 : vector<8x4xf32>
    %c4_i32 = arith.constant 4 : i32
    %46 = vector.broadcast %c4_i32 : i32 to vector<8x4xi32>
    %47 = arith.select %45, %41, %46 : vector<8x4xi1>, vector<8x4xi32>
    %cst_18 = arith.constant dense<2147483647> : vector<8xi32>
    %48 = vector.multi_reduction <minsi>, %47, %cst_18 [1] : vector<8x4xi32> to vector<8xi32>
    %49 = vector.shape_cast %48 : vector<8xi32> to vector<8x1xi32>
    %50 = vector.broadcast %49 : vector<8x1xi32> to vector<8x4xi32>
    %51 = arith.cmpi eq, %41, %50 : vector<8x4xi32>
    %cst_19 = arith.constant 0.000000e+00 : f32
    %52 = vector.broadcast %cst_19 : f32 to vector<8x4xf32>
    %53 = arith.select %51, %29, %52 : vector<8x4xi1>, vector<8x4xf32>
    %cst_20 = arith.constant dense<0.000000e+00> : vector<8xf32>
    %54 = vector.multi_reduction <add>, %53, %cst_20 [1] : vector<8x4xf32> to vector<8xf32>
    %55 = vector.shape_cast %54 : vector<8xf32> to vector<8x1xf32>
    %56 = tpu.iota {dimensions = array<i32: 1>} : vector<8x2xi32>
    %cst_21 = arith.constant dense<0xFF800000> : vector<8xf32>
    %57 = vector.multi_reduction <maximumf>, %40, %cst_21 [1] : vector<8x2xf32> to vector<8xf32>
    %58 = vector.shape_cast %57 : vector<8xf32> to vector<8x1xf32>
    %59 = vector.broadcast %58 : vector<8x1xf32> to vector<8x2xf32>
    %60 = arith.cmpf oeq, %40, %59 : vector<8x2xf32>
    %c2_i32 = arith.constant 2 : i32
    %61 = vector.broadcast %c2_i32 : i32 to vector<8x2xi32>
    %62 = arith.select %60, %56, %61 : vector<8x2xi1>, vector<8x2xi32>
    %cst_22 = arith.constant dense<2147483647> : vector<8xi32>
    %63 = vector.multi_reduction <minsi>, %62, %cst_22 [1] : vector<8x2xi32> to vector<8xi32>
    %64 = vector.shape_cast %63 : vector<8xi32> to vector<8x1xi32>
    %65 = vector.broadcast %64 : vector<8x1xi32> to vector<8x2xi32>
    %66 = arith.cmpi eq, %56, %65 : vector<8x2xi32>
    %cst_23 = arith.constant 0.000000e+00 : f32
    %67 = vector.broadcast %cst_23 : f32 to vector<8x2xf32>
    %68 = arith.select %66, %40, %67 : vector<8x2xi1>, vector<8x2xf32>
    %cst_24 = arith.constant dense<0.000000e+00> : vector<8xf32>
    %69 = vector.multi_reduction <add>, %68, %cst_24 [1] : vector<8x2xf32> to vector<8xf32>
    %70 = vector.shape_cast %69 : vector<8xf32> to vector<8x1xf32>
    %71 = arith.addf %55, %70 : vector<8x1xf32>
    %72 = arith.sitofp %49 : vector<8x1xi32> to vector<8x1xf32>
    %73 = arith.sitofp %64 : vector<8x1xi32> to vector<8x1xf32>
    %cst_25 = arith.constant 0.000000e+00 : f32
    %74 = vector.broadcast %cst_25 : f32 to vector<8x118xf32>
    %75 = tpu.concatenate %18, %29, %40, %71, %72, %73, %74 in 1 : vector<8x1xf32>, vector<8x4xf32>, vector<8x2xf32>, vector<8x1xf32>, vector<8x1xf32>, vector<8x1xf32>, vector<8x118xf32> -> vector<8x128xf32>
    %c0_26 = arith.constant 0 : index
    %c0_27 = arith.constant 0 : index
    %76 = vector.load %arg6[%c0_26, %c0_27] : memref<8x128xf32, #tpu.memory_space<vmem>>, vector<8x128xf32>
    tpu.vector_store %arg6[%c0_26, %c0_27], %75 {strides = array<i32>} : memref<8x128xf32, #tpu.memory_space<vmem>>, vector<8x128xf32>,
    return
  }
  func.func @transform_0(%arg0: i32) -> (i32, i32) {
    %c0_i32 = arith.constant 0 : i32
    %c0_i32_0 = arith.constant 0 : i32
    return %arg0, %c0_i32 : i32, i32
  }
  func.func @transform_1(%arg0: i32) -> (i32, i32) {
    %c0_i32 = arith.constant 0 : i32
    %c0_i32_0 = arith.constant 0 : i32
    %c0_i32_1 = arith.constant 0 : i32
    return %c0_i32, %c0_i32_0 : i32, i32
  }
  func.func @transform_2(%arg0: i32) -> (i32, i32) {
    %c0_i32 = arith.constant 0 : i32
    %c0_i32_0 = arith.constant 0 : i32
    %c0_i32_1 = arith.constant 0 : i32
    return %c0_i32, %c0_i32_0 : i32, i32
  }
  func.func @transform_3(%arg0: i32) -> (i32, i32) {
    %c0_i32 = arith.constant 0 : i32
    %c0_i32_0 = arith.constant 0 : i32
    %c0_i32_1 = arith.constant 0 : i32
    return %c0_i32, %c0_i32_0 : i32, i32
  }
  func.func @transform_4(%arg0: i32) -> (i32, i32) {
    %c0_i32 = arith.constant 0 : i32
    %c0_i32_0 = arith.constant 0 : i32
    %c0_i32_1 = arith.constant 0 : i32
    return %c0_i32, %c0_i32_0 : i32, i32
  }
  func.func @transform_5(%arg0: i32) -> (i32, i32) {
    %c0_i32 = arith.constant 0 : i32
    %c0_i32_0 = arith.constant 0 : i32
    return %arg0, %c0_i32 : i32, i32
  }
}

</mosaic_0001>

<llo_original>
// kernel: mynet_act.1
$region0: #{mynet_act.1}
  #allocation0 [shape = 'u32[]', space=smem, size = 0x4, offset = 0x4, fixed_abs, tag = 'smem constant byte address 0x4 - core index']
  #allocation1 [shape = 'u32[144,128]{1,0:T(1,128)}', space=vmem, size = 0x12000, scoped, tag = 'internal scratch']
  %s0 = inlined_call_operand.hbm [shape: f32[8,32], index: 0, kind: input, shape index: {}]
  %s1 = inlined_call_operand.hbm [shape: f32[32,128], index: 1, kind: input, shape index: {}]
  %s2 = inlined_call_operand.hbm [shape: f32[128,128], index: 2, kind: input, shape index: {}]
  %s3 = inlined_call_operand.hbm [shape: f32[128,128], index: 3, kind: input, shape index: {}]
  %s4 = inlined_call_operand.hbm [shape: f32[3,128], index: 4, kind: input, shape index: {}]
  %s5 = inlined_call_operand.vmem [shape: f32[8,128], index: 5, kind: output, shape index: {}]
  %s6 = sld [smem:[#allocation0]]
  $region50: #{mynet_act.1} parent=0
    _
  %s8 = ssub.s32 1, %s6
  %s9 = scalar_select 0, %s8, %s6
  $region1: #{mynet_act.1} parent=0
    #allocation2 [shape = 'u8[4096]{0}', space=vmem, size = 0x1000, scoped, tag = 'input window, operand 0, single buffered']
    #allocation3 [shape = 's32[1]{0}', space=sflag, size = 0x4, scoped, tag = 'scoped memory for mynet_act.1']
    #allocation4 [shape = 'u8[16384]{0}', space=vmem, size = 0x4000, scoped, tag = 'input window, operand 1, single buffered']
    #allocation5 [shape = 's32[1]{0}', space=sflag, size = 0x4, scoped, tag = 'scoped memory for mynet_act.1']
    #allocation6 [shape = 'u8[65536]{0}', space=vmem, size = 0x10000, scoped, tag = 'input window, operand 2, single buffered']
    #allocation7 [shape = 'u8[65536]{0}', space=vmem, size = 0x10000, scoped, tag = 'input window, operand 3, single buffered']
    #allocation8 [shape = 's32[1]{0}', space=sflag, size = 0x4, scoped, tag = 'scoped memory for mynet_act.1']
    #allocation9 [shape = 'u8[2048]{0}', space=vmem, size = 0x800, scoped, tag = 'input window, operand 4, single buffered']
    %10 = vsyncpa [#allocation3], 0
    %11 = vsyncpa [#allocation5], 0
    %12 = vsyncpa [#allocation8], 0
    // Predicated region
    $region2: #{mynet_act.1} parent=1 // pred_check
      _
    $region3: #{mynet_act.1} parent=1 // pred_check_branch
      %14 = sbr.rel (0) target = $region5
    $region4: #{mynet_act.1} parent=1 // pred_region
      %s16 = ssub.s32 128, 128
      %17 = vsyncadd [#allocation3], %s16
      %s19 = sshll.u32 [#allocation2], 4
      %s20 = int_to_ptr.vmem [resolvable:$true] %s19
      %22 = dma.hbm_to_vmem [thread:$0]  %s0, 128, %s20, [#allocation3]
    $region5: #{mynet_act.1} parent=1 // pred_fallthru
      _
    // Predicated region
    $region6: #{mynet_act.1} parent=1 // pred_check
      _
    $region7: #{mynet_act.1} parent=1 // pred_check_branch
      %24 = sbr.rel (0) target = $region9
    $region8: #{mynet_act.1} parent=1 // pred_region
      %s26 = ssub.s32 512, 512
      %27 = vsyncadd [#allocation5], %s26
      %s28 = sshll.u32 [#allocation4], 4
      %s29 = int_to_ptr.vmem [resolvable:$true] %s28
      %34 = dma.hbm_to_vmem [thread:$0]  %s1, 512, %s29, [#allocation5], 128, 128, 8
    $region9: #{mynet_act.1} parent=1 // pred_fallthru
      _
    // Predicated region
    $region10: #{mynet_act.1} parent=1 // pred_check
      _
    $region11: #{mynet_act.1} parent=1 // pred_check_branch
      %36 = sbr.rel (0) target = $region13
    $region12: #{mynet_act.1} parent=1 // pred_region
      %s38 = ssub.s32 2048, 2048
      %39 = vsyncadd [#allocation5], %s38
      %s40 = sshll.u32 [#allocation6], 4
      %s41 = int_to_ptr.vmem [resolvable:$true] %s40
      %46 = dma.hbm_to_vmem [thread:$0]  %s2, 2048, %s41, [#allocation5], 128, 128, 8
    $region13: #{mynet_act.1} parent=1 // pred_fallthru
      _
    // Predicated region
    $region14: #{mynet_act.1} parent=1 // pred_check
      _
    $region15: #{mynet_act.1} parent=1 // pred_check_branch
      %48 = sbr.rel (0) target = $region17
    $region16: #{mynet_act.1} parent=1 // pred_region
      %s50 = ssub.s32 2048, 2048
      %51 = vsyncadd [#allocation8], %s50
      %s52 = sshll.u32 [#allocation7], 4
      %s53 = int_to_ptr.vmem [resolvable:$true] %s52
      %58 = dma.hbm_to_vmem [thread:$0]  %s3, 2048, %s53, [#allocation8], 128, 128, 8
    $region17: #{mynet_act.1} parent=1 // pred_fallthru
      _
    // Predicated region
    $region18: #{mynet_act.1} parent=1 // pred_check
      _
    $region19: #{mynet_act.1} parent=1 // pred_check_branch
      %60 = sbr.rel (0) target = $region21
    $region20: #{mynet_act.1} parent=1 // pred_region
      %s62 = ssub.s32 64, 64
      %63 = vsyncadd [#allocation8], %s62
      %s65 = sshll.u32 [#allocation9], 4
      %s66 = int_to_ptr.vmem [resolvable:$true] %s65
      %68 = dma.hbm_to_vmem [thread:$0]  %s4, 64, %s66, [#allocation8]
    $region21: #{mynet_act.1} parent=1 // pred_fallthru
      _
    // Predicated region
    $region22: #{mynet_act.1} parent=1 // pred_check
      _
    $region23: #{mynet_act.1} parent=1 // pred_check_branch
      %70 = sbr.rel (0) target = $region25
    $region24: #{mynet_act.1} parent=1 // pred_region
      %71 = dma.done [#allocation3], 128
    $region25: #{mynet_act.1} parent=1 // pred_fallthru
      _
    // Predicated region
    $region26: #{mynet_act.1} parent=1 // pred_check
      _
    $region27: #{mynet_act.1} parent=1 // pred_check_branch
      %73 = sbr.rel (0) target = $region29
    $region28: #{mynet_act.1} parent=1 // pred_region
      %74 = dma.done [#allocation5], 512
    $region29: #{mynet_act.1} parent=1 // pred_fallthru
      _
    // Predicated region
    $region30: #{mynet_act.1} parent=1 // pred_check
      _
    $region31: #{mynet_act.1} parent=1 // pred_check_branch
      %76 = sbr.rel (0) target = $region33
    $region32: #{mynet_act.1} parent=1 // pred_region
      %77 = dma.done [#allocation5], 2048
    $region33: #{mynet_act.1} parent=1 // pred_fallthru
      _
    // Predicated region
    $region34: #{mynet_act.1} parent=1 // pred_check
      _
    $region35: #{mynet_act.1} parent=1 // pred_check_branch
      %79 = sbr.rel (0) target = $region37
    $region36: #{mynet_act.1} parent=1 // pred_region
      %80 = dma.done [#allocation8], 2048
    $region37: #{mynet_act.1} parent=1 // pred_fallthru
      _
    // Predicated region
    $region38: #{mynet_act.1} parent=1 // pred_check
      _
    $region39: #{mynet_act.1} parent=1 // pred_check_branch
      %82 = sbr.rel (0) target = $region41
    $region40: #{mynet_act.1} parent=1 // pred_region
      %83 = dma.done [#allocation8], 64
    $region41: #{mynet_act.1} parent=1 // pred_fallthru
      _
    %v84 = vld [vmem:[#allocation2] sm:$0xff]
    %v85 = vld [vmem:[#allocation9] sm:$0x1]
    %v86 = vld [vmem:[#allocation9 + $0x1] sm:$0x1]
    %v87 = vld [vmem:[#allocation9 + $0x2] sm:$0x1]
    %v88 = vld [vmem:[#allocation4] sm:$0xff]
    %v89 = vld [vmem:[#allocation4 + $0x8] sm:$0xff]
    %v90 = vld [vmem:[#allocation4 + $0x10] sm:$0xff]
    %v91 = vld [vmem:[#allocation4 + $0x18] sm:$0xff]
    %v92 = vlaneseq
    %v93 = vshrl.u32 %v92, 7
    %v94 = vsub.s32 0, %v93
    %v95 = vrot.slane %v85, %v94
    %vm96 = vcmask 261120
    %v98 = vsel %vm96, %v84, 0
    %100 = vmatprep.subr.mxu0 0.0
    %101 = vmatpush1.msra.mxu0 0.0
    %102 = vmatprep.subr.mxu0 0.0
    %103 = vmatpush1.msra.mxu0 0.0
    %104 = vmatprep.subr.mxu0 0.0
    %105 = vmatpush1.msra.mxu0 0.0
    %106 = vmatprep.subr.mxu0 0.0
    %107 = vmatpush1.msra.mxu0 0.0
    %108 = vmatprep.subr.mxu0 0.0
    %109 = vmatpush1.msra.mxu0 0.0
    %110 = vmatprep.subr.mxu0 0.0
    %111 = vmatpush1.msra.mxu0 0.0
    %112 = vmatprep.subr.mxu0 0.0
    %113 = vmatpush1.msra.mxu0 0.0
    %114 = vmatprep.subr.mxu0 0.0
    %115 = vmatpush1.msra.mxu0 0.0
    %116 = vmatprep.subr.mxu0 0.0
    %117 = vmatpush1.msra.mxu0 0.0
    %118 = vmatprep.subr.mxu0 0.0
    %119 = vmatpush1.msra.mxu0 0.0
    %120 = vmatprep.subr.mxu0 0.0
    %121 = vmatpush1.msra.mxu0 0.0
    %122 = vmatprep.subr.mxu0 0.0
    %123 = vmatpush1.msra.mxu0 0.0
    %124 = vmatprep.subr.mxu0 0.0
    %125 = vmatpush1.msra.mxu0 %v91
    %126 = vmatprep.subr.mxu0 0.0
    %127 = vmatpush1.msra.mxu0 %v90
    %128 = vmatprep.subr.mxu0 0.0
    %129 = vmatpush1.msra.mxu0 %v89
    %130 = vmatprep.subr.mxu0 0.0
    %131 = vmatpush1.msra.mxu0 %v88
    %132 = vmatprep.subr.mxu0 0.0
    %133 = vmatpush2.msra.mxu0 0.0
    %134 = vmatprep.subr.mxu0 0.0
    %135 = vmatpush2.msra.mxu0 0.0
    %136 = vmatprep.subr.mxu0 0.0
    %137 = vmatpush2.msra.mxu0 0.0
    %138 = vmatprep.subr.mxu0 0.0
    %139 = vmatpush2.msra.mxu0 0.0
    %140 = vmatprep.subr.mxu0 0.0
    %141 = vmatpush2.msra.mxu0 0.0
    %142 = vmatprep.subr.mxu0 0.0
    %143 = vmatpush2.msra.mxu0 0.0
    %144 = vmatprep.subr.mxu0 0.0
    %145 = vmatpush2.msra.mxu0 0.0
    %146 = vmatprep.subr.mxu0 0.0
    %147 = vmatpush2.msra.mxu0 0.0
    %148 = vmatprep.subr.mxu0 0.0
    %149 = vmatpush2.msra.mxu0 0.0
    %150 = vmatprep.subr.mxu0 0.0
    %151 = vmatpush2.msra.mxu0 0.0
    %152 = vmatprep.subr.mxu0 0.0
    %153 = vmatpush2.msra.mxu0 0.0
    %154 = vmatprep.subr.mxu0 0.0
    %155 = vmatpush2.msra.mxu0 0.0
    %156 = vmatprep.subr.mxu0 0.0
    %157 = vmatpush2.msra.mxu0 0.0
    %158 = vmatprep.subr.mxu0 0.0
    %159 = vmatpush2.msra.mxu0 0.0
    %160 = vmatprep.subr.mxu0 0.0
    %161 = vmatpush2.msra.mxu0 0.0
    %162 = vmatprep.subr.mxu0 0.0
    %163 = vmatpush2.msra.mxu0 0.0
    %164 = vmatprep.mubr.f32.mxu0 0.0
    %165 = vmatmul.mubr.f32.gmra.mxu0 %v98
    %v166 = vpop.f32.mrf.mxu0
    %v167 = vadd.f32 %v95, %v166
    %v168 = vpop.f32.mrf.mxu0
    %169 = vdwg.mxu0
    %v170 = vtanh.pop %v167
    %v171 = vld [vmem:[#allocation6] sm:$0xff]
    %v172 = vld [vmem:[#allocation6 + $0x8] sm:$0xff]
    %v173 = vld [vmem:[#allocation6 + $0x10] sm:$0xff]
    %v174 = vld [vmem:[#allocation6 + $0x18] sm:$0xff]
    %v175 = vld [vmem:[#allocation6 + $0x20] sm:$0xff]
    %v176 = vld [vmem:[#allocation6 + $0x28] sm:$0xff]
    %v177 = vld [vmem:[#allocation6 + $0x30] sm:$0xff]
    %v178 = vld [vmem:[#allocation6 + $0x38] sm:$0xff]
    %v179 = vld [vmem:[#allocation6 + $0x40] sm:$0xff]
    %v180 = vld [vmem:[#allocation6 + $0x48] sm:$0xff]
    %v181 = vld [vmem:[#allocation6 + $0x50] sm:$0xff]
    %v182 = vld [vmem:[#allocation6 + $0x58] sm:$0xff]
    %v183 = vld [vmem:[#allocation6 + $0x60] sm:$0xff]
    %v184 = vld [vmem:[#allocation6 + $0x68] sm:$0xff]
    %v185 = vld [vmem:[#allocation6 + $0x70] sm:$0xff]
    %v186 = vld [vmem:[#allocation6 + $0x78] sm:$0xff]
    %v187 = vlaneseq
    %v188 = vshrl.u32 %v187, 7
    %v189 = vsub.s32 0, %v188
    %v190 = vrot.slane %v86, %v189
    %191 = vmatprep.subr.mxu0 0.0
    %192 = vmatpush1.msra.mxu0 %v186
    %193 = vmatprep.subr.mxu0 0.0
    %194 = vmatpush1.msra.mxu0 %v185
    %195 = vmatprep.subr.mxu0 0.0
    %196 = vmatpush1.msra.mxu0 %v184
    %197 = vmatprep.subr.mxu0 0.0
    %198 = vmatpush1.msra.mxu0 %v183
    %199 = vmatprep.subr.mxu0 0.0
    %200 = vmatpush1.msra.mxu0 %v182
    %201 = vmatprep.subr.mxu0 0.0
    %202 = vmatpush1.msra.mxu0 %v181
    %203 = vmatprep.subr.mxu0 0.0
    %204 = vmatpush1.msra.mxu0 %v180
    %205 = vmatprep.subr.mxu0 0.0
    %206 = vmatpush1.msra.mxu0 %v179
    %207 = vmatprep.subr.mxu0 0.0
    %208 = vmatpush1.msra.mxu0 %v178
    %209 = vmatprep.subr.mxu0 0.0
    %210 = vmatpush1.msra.mxu0 %v177
    %211 = vmatprep.subr.mxu0 0.0
    %212 = vmatpush1.msra.mxu0 %v176
    %213 = vmatprep.subr.mxu0 0.0
    %214 = vmatpush1.msra.mxu0 %v175
    %215 = vmatprep.subr.mxu0 0.0
    %216 = vmatpush1.msra.mxu0 %v174
    %217 = vmatprep.subr.mxu0 0.0
    %218 = vmatpush1.msra.mxu0 %v173
    %219 = vmatprep.subr.mxu0 0.0
    %220 = vmatpush1.msra.mxu0 %v172
    %221 = vmatprep.subr.mxu0 0.0
    %222 = vmatpush1.msra.mxu0 %v171
    %223 = vmatprep.subr.mxu0 0.0
    %224 = vmatpush2.msra.mxu0 0.0
    %225 = vmatprep.subr.mxu0 0.0
    %226 = vmatpush2.msra.mxu0 0.0
    %227 = vmatprep.subr.mxu0 0.0
    %228 = vmatpush2.msra.mxu0 0.0
    %229 = vmatprep.subr.mxu0 0.0
    %230 = vmatpush2.msra.mxu0 0.0
    %231 = vmatprep.subr.mxu0 0.0
    %232 = vmatpush2.msra.mxu0 0.0
    %233 = vmatprep.subr.mxu0 0.0
    %234 = vmatpush2.msra.mxu0 0.0
    %235 = vmatprep.subr.mxu0 0.0
    %236 = vmatpush2.msra.mxu0 0.0
    %237 = vmatprep.subr.mxu0 0.0
    %238 = vmatpush2.msra.mxu0 0.0
    %239 = vmatprep.subr.mxu0 0.0
    %240 = vmatpush2.msra.mxu0 0.0
    %241 = vmatprep.subr.mxu0 0.0
    %242 = vmatpush2.msra.mxu0 0.0
    %243 = vmatprep.subr.mxu0 0.0
    %244 = vmatpush2.msra.mxu0 0.0
    %245 = vmatprep.subr.mxu0 0.0
    %246 = vmatpush2.msra.mxu0 0.0
    %247 = vmatprep.subr.mxu0 0.0
    %248 = vmatpush2.msra.mxu0 0.0
    %249 = vmatprep.subr.mxu0 0.0
    %250 = vmatpush2.msra.mxu0 0.0
    %251 = vmatprep.subr.mxu0 0.0
    %252 = vmatpush2.msra.mxu0 0.0
    %253 = vmatprep.subr.mxu0 0.0
    %254 = vmatpush2.msra.mxu0 0.0
    %255 = vmatprep.mubr.f32.mxu0 0.0
    %256 = vmatmul.mubr.f32.gmra.mxu0 %v170
    %v257 = vpop.f32.mrf.mxu0
    %v258 = vadd.f32 %v190, %v257
    %v259 = vpop.f32.mrf.mxu0
    %260 = vdwg.mxu0
    %v261 = vtanh.pop %v258
    %v262 = vld [vmem:[#allocation7] sm:$0xff]
    %v263 = vld [vmem:[#allocation7 + $0x8] sm:$0xff]
    %v264 = vld [vmem:[#allocation7 + $0x10] sm:$0xff]
    %v265 = vld [vmem:[#allocation7 + $0x18] sm:$0xff]
    %v266 = vld [vmem:[#allocation7 + $0x20] sm:$0xff]
    %v267 = vld [vmem:[#allocation7 + $0x28] sm:$0xff]
    %v268 = vld [vmem:[#allocation7 + $0x30] sm:$0xff]
    %v269 = vld [vmem:[#allocation7 + $0x38] sm:$0xff]
    %v270 = vld [vmem:[#allocation7 + $0x40] sm:$0xff]
    %v271 = vld [vmem:[#allocation7 + $0x48] sm:$0xff]
    %v272 = vld [vmem:[#allocation7 + $0x50] sm:$0xff]
    %v273 = vld [vmem:[#allocation7 + $0x58] sm:$0xff]
    %v274 = vld [vmem:[#allocation7 + $0x60] sm:$0xff]
    %v275 = vld [vmem:[#allocation7 + $0x68] sm:$0xff]
    %v276 = vld [vmem:[#allocation7 + $0x70] sm:$0xff]
    %v277 = vld [vmem:[#allocation7 + $0x78] sm:$0xff]
    %v278 = vlaneseq
    %v279 = vshrl.u32 %v278, 7
    %v280 = vsub.s32 0, %v279
    %v281 = vrot.slane %v87, %v280
    %282 = vmatprep.subr.mxu0 0.0
    %283 = vmatpush1.msra.mxu0 %v277
    %284 = vmatprep.subr.mxu0 0.0
    %285 = vmatpush1.msra.mxu0 %v276
    %286 = vmatprep.subr.mxu0 0.0
    %287 = vmatpush1.msra.mxu0 %v275
    %288 = vmatprep.subr.mxu0 0.0
    %289 = vmatpush1.msra.mxu0 %v274
    %290 = vmatprep.subr.mxu0 0.0
    %291 = vmatpush1.msra.mxu0 %v273
    %292 = vmatprep.subr.mxu0 0.0
    %293 = vmatpush1.msra.mxu0 %v272
    %294 = vmatprep.subr.mxu0 0.0
    %295 = vmatpush1.msra.mxu0 %v271
    %296 = vmatprep.subr.mxu0 0.0
    %297 = vmatpush1.msra.mxu0 %v270
    %298 = vmatprep.subr.mxu0 0.0
    %299 = vmatpush1.msra.mxu0 %v269
    %300 = vmatprep.subr.mxu0 0.0
    %301 = vmatpush1.msra.mxu0 %v268
    %302 = vmatprep.subr.mxu0 0.0
    %303 = vmatpush1.msra.mxu0 %v267
    %304 = vmatprep.subr.mxu0 0.0
    %305 = vmatpush1.msra.mxu0 %v266
    %306 = vmatprep.subr.mxu0 0.0
    %307 = vmatpush1.msra.mxu0 %v265
    %308 = vmatprep.subr.mxu0 0.0
    %309 = vmatpush1.msra.mxu0 %v264
    %310 = vmatprep.subr.mxu0 0.0
    %311 = vmatpush1.msra.mxu0 %v263
    %312 = vmatprep.subr.mxu0 0.0
    %313 = vmatpush1.msra.mxu0 %v262
    %314 = vmatprep.subr.mxu0 0.0
    %315 = vmatpush2.msra.mxu0 0.0
    %316 = vmatprep.subr.mxu0 0.0
    %317 = vmatpush2.msra.mxu0 0.0
    %318 = vmatprep.subr.mxu0 0.0
    %319 = vmatpush2.msra.mxu0 0.0
    %320 = vmatprep.subr.mxu0 0.0
    %321 = vmatpush2.msra.mxu0 0.0
    %322 = vmatprep.subr.mxu0 0.0
    %323 = vmatpush2.msra.mxu0 0.0
    %324 = vmatprep.subr.mxu0 0.0
    %325 = vmatpush2.msra.mxu0 0.0
    %326 = vmatprep.subr.mxu0 0.0
    %327 = vmatpush2.msra.mxu0 0.0
    %328 = vmatprep.subr.mxu0 0.0
    %329 = vmatpush2.msra.mxu0 0.0
    %330 = vmatprep.subr.mxu0 0.0
    %331 = vmatpush2.msra.mxu0 0.0
    %332 = vmatprep.subr.mxu0 0.0
    %333 = vmatpush2.msra.mxu0 0.0
    %334 = vmatprep.subr.mxu0 0.0
    %335 = vmatpush2.msra.mxu0 0.0
    %336 = vmatprep.subr.mxu0 0.0
    %337 = vmatpush2.msra.mxu0 0.0
    %338 = vmatprep.subr.mxu0 0.0
    %339 = vmatpush2.msra.mxu0 0.0
    %340 = vmatprep.subr.mxu0 0.0
    %341 = vmatpush2.msra.mxu0 0.0
    %342 = vmatprep.subr.mxu0 0.0
    %343 = vmatpush2.msra.mxu0 0.0
    %344 = vmatprep.subr.mxu0 0.0
    %345 = vmatpush2.msra.mxu0 0.0
    %346 = vmatprep.mubr.f32.mxu0 0.0
    %347 = vmatmul.mubr.f32.gmra.mxu0 %v261
    %v348 = vpop.f32.mrf.mxu0
    %v349 = vadd.f32 %v281, %v348
    %v350 = vpop.f32.mrf.mxu0
    %351 = vdwg.mxu0
    %vm352 = vcmask 39944
    %v353 = vsel %vm352, %v349, -inf
    %354 = vmax.xlane.f32.xlu0 %v353
    %v355 = vpop.xlane.xlu0 %354
    %v356 = vsub.f32 %v349, %v355
    %v357 = vmul.f32 %v356, 1.442695
    %v358 = vpow.pop %v357
    %360 = vrot.lane.b32.xlu0 %v358, 127
    %v361 = vpop.permute.xlu0 %360
    %vm363 = vcmask 31744
    %v364 = vsel %vm363, %v361, 0.0
    %365 = vadd.xlane.f32.xlu0 %v364
    %v366 = vpop.xlane.xlu0 %365
    %v367 = vlog2.pop %v366
    %v368 = vmul.f32 %v367, 0.6931472
    %v369 = vsub.f32 %v356, %v368
    %vm370 = vcmask 56360
    %v371 = vsel %vm370, %v349, -inf
    %372 = vmax.xlane.f32.xlu0 %v371
    %v373 = vpop.xlane.xlu0 %372
    %v374 = vsub.f32 %v349, %v373
    %v375 = vmul.f32 %v374, 1.442695
    %v376 = vpow.pop %v375
    %378 = vrot.lane.b32.xlu0 %v376, 123
    %v379 = vpop.permute.xlu0 %378
    %vm381 = vcmask 15360
    %v382 = vsel %vm381, %v379, 0.0
    %383 = vadd.xlane.f32.xlu0 %v382
    %v384 = vpop.xlane.xlu0 %383
    %v385 = vlog2.pop %v384
    %v386 = vmul.f32 %v385, 0.6931472
    %v387 = vsub.f32 %v374, %v386
    %v388 = vlaneseq
    %v389 = vand.u32 %v388, 127
    %v390 = vsel %vm352, %v369, -inf
    %391 = vmax.xlane.f32.xlu0 %v390
    %v392 = vpop.xlane.xlu0 %391
    %vm393 = vcmp.eq.f32.partialorder %v369, %v392
    %394 = vrot.lane.b32.xlu0 %v389, 1
    %v395 = vpop.permute.xlu0 %394
    %v396 = vsel %vm393, %v395, 4
    %v397 = vsel %vm352, %v396, 2147483647
    %v398 = vand.u32 %v397, 65535
    %v399 = vshra.s32 %v397, 16
    %v400 = vcvt.s32.f32 %v398
    %v401 = vcvt.s32.f32 %v399
    %402 = vmin.xlane.f32.xlu0 %v401
    %v403 = vpop.xlane.xlu0 %402
    %vm404 = vcmp.eq.f32.partialorder %v401, %v403
    %v405 = vsel %vm404, %v400, inf
    %406 = vmin.xlane.f32.xlu0 %v405
    %v407 = vpop.xlane.xlu0 %406
    %v408 = vcvt.f32.s32 %v407
    %v409 = vcvt.f32.s32 %v403
    %v410 = vshll.u32 %v409, 16
    %v411 = vadd.s32 %v410, %v408
    %vm412 = vcmp.eq.s32.totalorder %v389, %v411
    %414 = vrot.lane.b32.xlu0 %v369, 127
    %v415 = vpop.permute.xlu0 %414
    %v417 = vsel %vm412, %v415, 0.0
    %v418 = vsel %vm363, %v417, 0.0
    %419 = vadd.xlane.f32.xlu0 %v418
    %v420 = vpop.xlane.xlu0 %419
    %v421 = vsel %vm370, %v387, -inf
    %422 = vmax.xlane.f32.xlu0 %v421
    %v423 = vpop.xlane.xlu0 %422
    %vm424 = vcmp.eq.f32.partialorder %v387, %v423
    %425 = vrot.lane.b32.xlu0 %v389, 5
    %v426 = vpop.permute.xlu0 %425
    %v427 = vsel %vm424, %v426, 2
    %v428 = vsel %vm370, %v427, 2147483647
    %v429 = vand.u32 %v428, 65535
    %v430 = vshra.s32 %v428, 16
    %v431 = vcvt.s32.f32 %v429
    %v432 = vcvt.s32.f32 %v430
    %433 = vmin.xlane.f32.xlu0 %v432
    %v434 = vpop.xlane.xlu0 %433
    %vm435 = vcmp.eq.f32.partialorder %v432, %v434
    %v436 = vsel %vm435, %v431, inf
    %437 = vmin.xlane.f32.xlu0 %v436
    %v438 = vpop.xlane.xlu0 %437
    %v439 = vcvt.f32.s32 %v438
    %v440 = vcvt.f32.s32 %v434
    %v441 = vshll.u32 %v440, 16
    %v442 = vadd.s32 %v441, %v439
    %vm443 = vcmp.eq.s32.totalorder %v389, %v442
    %445 = vrot.lane.b32.xlu0 %v387, 123
    %v446 = vpop.permute.xlu0 %445
    %v448 = vsel %vm443, %v446, 0.0
    %v449 = vsel %vm381, %v448, 0.0
    %450 = vadd.xlane.f32.xlu0 %v449
    %v451 = vpop.xlane.xlu0 %450
    %v452 = vadd.f32 %v420, %v451
    %v453 = vcvt.s32.f32 %v411
    %v454 = vcvt.s32.f32 %v442
    %vm455 = vcmask 7168
    %v456 = vsel %vm455, %v349, %v369
    %vm457 = vcmask 39936
    %v458 = vsel %vm457, %v456, %v387
    %vm459 = vcmask 56320
    %v460 = vsel %vm459, %v458, %v452
    %vm461 = vcmask 64512
    %v462 = vsel %vm461, %v460, %v453
    %vm463 = vcmask 72704
    %v464 = vsel %vm463, %v462, %v454
    %vm465 = vcmask 80896
    %v466 = vsel %vm465, %v464, 0.0
    %467 = vst [vmem:[%s5] sm:$0xff] %v466
    // Predicated region
    $region42: #{mynet_act.1} parent=1 // pred_check
      _
    $region43: #{mynet_act.1} parent=1 // pred_check_branch
      %469 = sbr.rel (0) target = $region45
    $region44: #{mynet_act.1} parent=1 // pred_region
      _
    $region45: #{mynet_act.1} parent=1 // pred_fallthru
      _
    // Predicated region
    $region46: #{mynet_act.1} parent=1 // pred_check
      _
    $region47: #{mynet_act.1} parent=1 // pred_check_branch
      %471 = sbr.rel (0) target = $region49
    $region48: #{mynet_act.1} parent=1 // pred_region
      _
    $region49: #{mynet_act.1} parent=1 // pred_fallthru
      _
    %472 = vsyncpa [#allocation3], 1
    %473 = vsyncpa [#allocation5], 1
    %474 = vsyncpa [#allocation8], 1

</llo_original>
